<compile_context>
chip_gen: v6e
topology: v6e:2x2x1
jax: 0.10.0
libtpu: 0.0.40
codegen_flags: <defaults>
</compile_context>

<pallas_src>
import functools

import jax
import jax.numpy as jnp
from jax.experimental import pallas as pl
from jax.experimental.pallas import tpu as pltpu

_MIB = 1024 * 1024


def _round_up(x, m):
    return ((x + m - 1) // m) * m


def _vmem_capacity_bytes():
    try:
        return int(pltpu.get_tpu_info().vmem_capacity_bytes)
    except Exception:
        return 64 * _MIB  # conservative fallback (v7x per-TC VMEM)


def gated_mlp_kernel(x_ref, wgu_ref, wd_ref, o_ref, acc_ref, *, tn):
    # x_ref:   (tm, d_model)      token tile (resident across the k axis)
    # wgu_ref: (d_model, 2*tn)    chunk k of [gate | up] weights
    # wd_ref:  (tn, d_model)      chunk k of down_proj weights
    # o_ref:   (tm, d_model)      lane-dense output tile
    # acc_ref: (tm, d_model) f32  accumulator across the d_mlp reduction axis
    k = pl.program_id(1)
    last = pl.num_programs(1) - 1

    @pl.when(k == 0)
    def _():
        acc_ref[...] = jnp.zeros_like(acc_ref)

    x = x_ref[...]
    # Single MXU launch for gate+up: halves RHS load sequences, reads x once.
    gu = jnp.dot(x, wgu_ref[...], preferred_element_type=jnp.float32)
    gate = gu[:, :tn]
    up = gu[:, tn:]
    # SiLU in f32 on the f32 matmul output (sigmoid/exp goes to the EUP slot).
    hidden = (gate * jax.nn.sigmoid(gate)) * up
    # Partial down-projection for this d_mlp chunk.
    partial = jnp.dot(hidden.astype(x.dtype), wd_ref[...],
                      preferred_element_type=jnp.float32)

    @pl.when(k != last)
    def _():
        acc_ref[...] += partial

    @pl.when(k == last)
    def _():
        # Fused accumulate-and-store: skips one tm*d_model f32 store+load.
        o_ref[...] = (acc_ref[...] + partial).astype(o_ref.dtype)


def prepare_gated_mlp_weights(wg_t, wu_t, wd_t, *, tn=None, tn_target=None):
    """Build the chunk-major weight layout ONCE at weight-load time (cache it).

    wg_t, wu_t: (d_model, d_mlp)   (transposed vs. torch nn.Linear storage)
    wd_t:       (d_mlp, d_model)

    Returns (wgu, wd, tn):
      wgu: (n_k, d_model, 2*tn)  chunk-major [gate_k | up_k] blocks
      wd:  (n_k, tn, d_model)    chunk-major down-proj blocks
    """
    d_model, d_mlp = wg_t.shape
    if tn is None:
        if tn_target is None:
            # Smaller d_mlp chunk on 64 MiB-VMEM parts (v7x) so the token tile
            # can stay large; 512 on 128 MiB parts (v5e / v6e).
            tn_target = 256 if _vmem_capacity_bytes() < 100 * _MIB else 512
        tn = max((min(tn_target, _round_up(d_mlp, 128)) // 128) * 128, 128)

    d_mlp_pad = _round_up(d_mlp, tn)
    n_k = d_mlp_pad // tn
    pad = d_mlp_pad - d_mlp
    if pad:
        # Zero padding along d_mlp is exact (silu(0)*0 == 0, zero wd rows).
        wg_t = jnp.pad(wg_t, ((0, 0), (0, pad)))
        wu_t = jnp.pad(wu_t, ((0, 0), (0, pad)))
        wd_t = jnp.pad(wd_t, ((0, pad), (0, 0)))

    wgu = jnp.concatenate(
        [wg_t.reshape(d_model, n_k, tn), wu_t.reshape(d_model, n_k, tn)],
        axis=2,
    ).transpose(1, 0, 2)                     # (n_k, d_model, 2*tn), chunk-major
    wd = wd_t.reshape(n_k, tn, d_model)      # (n_k, tn, d_model),   chunk-major
    return wgu, wd, tn


def gated_mlp(x, wgu, wd, tn, *, tm=None):
    """x: (batch, seq, d_model); wgu/wd/tn from prepare_gated_mlp_weights.
    For best MXU throughput on v6e/v7x pass bf16 operands (accumulation is f32)."""
    batch, seq, d_model = x.shape
    n_k = wgu.shape[0]
    M = batch * seq
    itemsize = jnp.dtype(x.dtype).itemsize

    vmem_cap = _vmem_capacity_bytes()
    # ~8 MiB Mosaic headroom; never request over ~110 MiB even on 128 MiB parts.
    vmem_ceiling = min(vmem_cap - 8 * _MIB, 110 * _MIB)

    # ---- token-tile selection -------------------------------------------
    if tm is None:
        tm = 1024 if vmem_cap >= 100 * _MIB else 512
    m8 = _round_up(M, 8)
    tm = min(tm, m8)
    # Keep >= 2 token tiles when M permits so the "parallel" axis feeds both
    # v7x TensorCores (also harmless on single-TC chips).
    half = (m8 // 2) // 8 * 8
    if half >= 256:
        tm = min(tm, half)

    def vmem_estimate(tm_):
        return (
            2 * tm_ * d_model * itemsize        # x tile, double-buffered
            + 2 * d_model * 2 * tn * itemsize   # gate|up chunk, double-buffered
            + 2 * tn * d_model * itemsize       # down chunk, double-buffered
            + 2 * tm_ * d_model * itemsize      # output tile, double-buffered
            + tm_ * d_model * 4                 # f32 accumulator scratch
            + 2 * tm_ * 2 * tn * 4              # f32 gate/up/hidden intermediates
        )

    while tm > 256 and vmem_estimate(tm) > vmem_ceiling:
        tm = max(256, (tm // 2) // 8 * 8)
    m_pad = _round_up(M, tm)

    vmem_limit = int(min(max(vmem_estimate(tm) * 3 // 2, 32 * _MIB), vmem_ceiling))

    x2d = x.reshape(M, d_model)
    if m_pad != M:
        x2d = jnp.pad(x2d, ((0, m_pad - M), (0, 0)))  # zero rows -> zero outputs

    kernel = functools.partial(gated_mlp_kernel, tn=tn)
    # TODO(synk): on v5e only, sweep pipeline_mode=pl.Buffered(3) on the two
    # weight-chunk specs if DMA is exposed (plenty of VMEM there; not on v7x).
    out2d = pl.pallas_call(
        kernel,
        out_shape=jax.ShapeDtypeStruct((m_pad, d_model), x.dtype),
        grid_spec=pltpu.PrefetchScalarGridSpec(
            num_scalar_prefetch=0,
            grid=(m_pad // tm, n_k),              # d_mlp reduction axis last
            in_specs=[
                pl.BlockSpec((tm, d_model), lambda i, k: (i, 0)),
                # Chunk-major weights: each chunk is one contiguous DMA.
                pl.BlockSpec((pl.Squeezed(), d_model, 2 * tn),
                             lambda i, k: (k, 0, 0)),
                pl.BlockSpec((pl.Squeezed(), tn, d_model),
                             lambda i, k: (k, 0, 0)),
            ],
            out_specs=pl.BlockSpec((tm, d_model), lambda i, k: (i, 0)),
            scratch_shapes=[pltpu.VMEM((tm, d_model), jnp.float32)],
        ),
        compiler_params=pltpu.CompilerParams(
            dimension_semantics=("parallel", "arbitrary"),
            vmem_limit_bytes=vmem_limit,
        ),
    )(x2d, wgu, wd)

    return out2d[:M].reshape(batch, seq, d_model)


def gated_mlp_unprepared(x, wg_t, wu_t, wd_t, **kw):
    """Convenience wrapper (prepares weights per call; prefer caching them)."""
    wgu, wd, tn = prepare_gated_mlp_weights(wg_t, wu_t, wd_t)
    return gated_mlp(x, wgu, wd, tn, **kw)


def reference_gated_mlp(x, wg_t, wu_t, wd_t):
    gate = x @ wg_t
    up = x @ wu_t
    return (jax.nn.silu(gate) * up) @ wd_t


if __name__ == "__main__":
    # ---- Test 1: toy config matching the module (d_model=32, d_mlp_proj=64),
    # f32 operands, tight tolerance.  Exercises d_mlp zero-padding (64 -> 128).
    batch, seq, d_model, d_mlp = 2, 8, 32, 64
    key = jax.random.PRNGKey(0)
    kx, kg, ku, kd = jax.random.split(key, 4)

    x = jax.random.normal(kx, (batch, seq, d_model), dtype=jnp.float32)
    # PyTorch Linear stores (out, in); we keep the transpose (in, out).
    wg_t = (jax.random.normal(kg, (d_mlp, d_model), dtype=jnp.float32) * 0.05).T
    wu_t = (jax.random.normal(ku, (d_mlp, d_model), dtype=jnp.float32) * 0.05).T
    wd_t = (jax.random.normal(kd, (d_model, d_mlp), dtype=jnp.float32) * 0.05).T

    # Weight prep hoisted out of the hot path: build once, reuse per call.
    wgu1, wdc1, tn1 = prepare_gated_mlp_weights(wg_t, wu_t, wd_t)
    out = jax.block_until_ready(gated_mlp(x, wgu1, wdc1, tn1))
    ref = reference_gated_mlp(x, wg_t, wu_t, wd_t)
    assert out.shape == (batch, seq, d_model)
    assert jnp.allclose(out, ref, atol=1e-5, rtol=1e-5), "f32 mismatch vs reference"

    # ---- Test 2: lane-aligned sizes, bf16 operands (exercises both grid axes:
    # multiple token tiles x multiple d_mlp chunks, and the f32 accumulator path).
    batch2, seq2, d_model2, d_mlp2 = 2, 256, 256, 1024
    k2 = jax.random.PRNGKey(1)
    kx2, kg2, ku2, kd2 = jax.random.split(k2, 4)
    x2 = jax.random.normal(kx2, (batch2, seq2, d_model2), dtype=jnp.float32)
    wg2 = jax.random.normal(kg2, (d_model2, d_mlp2), dtype=jnp.float32) * 0.02
    wu2 = jax.random.normal(ku2, (d_model2, d_mlp2), dtype=jnp.float32) * 0.02
    wd2 = jax.random.normal(kd2, (d_mlp2, d_model2), dtype=jnp.float32) * 0.02

    x2b, wg2b = x2.astype(jnp.bfloat16), wg2.astype(jnp.bfloat16)
    wu2b, wd2b = wu2.astype(jnp.bfloat16), wd2.astype(jnp.bfloat16)
    wgu2, wdc2, tn2 = prepare_gated_mlp_weights(wg2b, wu2b, wd2b)
    out2 = jax.block_until_ready(gated_mlp(x2b, wgu2, wdc2, tn2))
    ref2 = reference_gated_mlp(
        x2b.astype(jnp.float32), wg2b.astype(jnp.float32),
        wu2b.astype(jnp.float32), wd2b.astype(jnp.float32))
    assert out2.shape == (batch2, seq2, d_model2)
    assert jnp.allclose(out2.astype(jnp.float32), ref2, atol=5e-2, rtol=5e-2), \
        "bf16 mismatch vs reference"

    # Convenience path (un-prepared weights) also works.
    out1b = jax.block_until_ready(gated_mlp_unprepared(x, wg_t, wu_t, wd_t))
    assert jnp.allclose(out1b, ref, atol=1e-5, rtol=1e-5)

    print("KERNEL_OK")
</pallas_src>

<mosaic_0001>
module attributes {stable_mosaic.version = 11 : i64} {
  func.func @gated_mlp_kernel(%arg0: i32, %arg1: i32, %arg2: memref<16x32xf32, #tpu.memory_space<vmem>>, %arg3: memref<1x32x256xf32, #tpu.memory_space<vmem>>, %arg4: memref<1x128x32xf32, #tpu.memory_space<vmem>>, %arg5: memref<16x32xf32, #tpu.memory_space<vmem>>, %arg6: memref<16x32xf32, #tpu.memory_space<vmem>>) attributes {dimension_semantics = [#tpu.dimension_semantics<parallel>, #tpu.dimension_semantics<arbitrary>], iteration_bounds = array<i64: 1, 1>, scalar_prefetch = 0 : i64, scratch_operands = 1 : i64, tpu.core_type = #tpu.core_type<tc>, window_params = [{transform_indices = @transform_0, window_bounds = array<i64: 16, 32>}, {transform_indices = @transform_1, window_bounds = array<i64: 1, 32, 256>}, {transform_indices = @transform_2, window_bounds = array<i64: 1, 128, 32>}, {transform_indices = @transform_3, window_bounds = array<i64: 16, 32>}]} {
    %c0_i32 = arith.constant 0 : i32
    %0 = arith.cmpi eq, %arg1, %c0_i32 : i32
    %1 = arith.extui %0 : i1 to i32
    %c0_i32_0 = arith.constant 0 : i32
    %2 = arith.cmpi ne, %1, %c0_i32_0 : i32
    scf.if %2 {
      %cst_14 = arith.constant 0.000000e+00 : f32
      %25 = vector.broadcast %cst_14 : f32 to vector<16x32xf32>
      %c0_15 = arith.constant 0 : index
      %c0_16 = arith.constant 0 : index
      %26 = vector.load %arg6[%c0_15, %c0_16] : memref<16x32xf32, #tpu.memory_space<vmem>>, vector<16x32xf32>
      tpu.vector_store %arg6[%c0_15, %c0_16], %25 {strides = array<i32>} : memref<16x32xf32, #tpu.memory_space<vmem>>, vector<16x32xf32>,
    } else {
    }
    %c0 = arith.constant 0 : index
    %c0_1 = arith.constant 0 : index
    %3 = vector.load %arg2[%c0, %c0_1] : memref<16x32xf32, #tpu.memory_space<vmem>>, vector<16x32xf32>
    %c0_2 = arith.constant 0 : index
    %c0_3 = arith.constant 0 : index
    %c0_4 = arith.constant 0 : index
    %4 = vector.load %arg3[%c0_2, %c0_3, %c0_4] : memref<1x32x256xf32, #tpu.memory_space<vmem>>, vector<1x32x256xf32>
    %5 = vector.shape_cast %4 : vector<1x32x256xf32> to vector<32x256xf32>
    %cst = arith.constant dense<0.000000e+00> : vector<16x256xf32>
    %6 = tpu.matmul %3, %5, %cst {dimension_numbers = #tpu.dot_dimension_numbers<[1], [0], [0], [1], [0, 0, 1, 1], [], []>} : vector<16x32xf32>, vector<32x256xf32>, vector<16x256xf32> -> vector<16x256xf32>
    %7 = vector.extract_strided_slice %6 {offsets = [0, 0], sizes = [16, 128], strides = [1, 1]} : vector<16x256xf32> to vector<16x128xf32>
    %8 = vector.extract_strided_slice %6 {offsets = [0, 128], sizes = [16, 128], strides = [1, 1]} : vector<16x256xf32> to vector<16x128xf32>
    %9 = arith.negf %7 : vector<16x128xf32>
    %10 = math.exp %9 : vector<16x128xf32>
    %cst_5 = arith.constant 1.000000e+00 : f32
    %11 = vector.broadcast %cst_5 : f32 to vector<16x128xf32>
    %12 = arith.addf %11, %10 : vector<16x128xf32>
    %13 = arith.divf %11, %12 : vector<16x128xf32>
    %14 = arith.mulf %7, %13 : vector<16x128xf32>
    %15 = arith.mulf %14, %8 : vector<16x128xf32>
    %c0_6 = arith.constant 0 : index
    %c0_7 = arith.constant 0 : index
    %c0_8 = arith.constant 0 : index
    %16 = vector.load %arg4[%c0_6, %c0_7, %c0_8] : memref<1x128x32xf32, #tpu.memory_space<vmem>>, vector<1x128x32xf32>
    %17 = vector.shape_cast %16 : vector<1x128x32xf32> to vector<128x32xf32>
    %cst_9 = arith.constant dense<0.000000e+00> : vector<16x32xf32>
    %18 = tpu.matmul %15, %17, %cst_9 {dimension_numbers = #tpu.dot_dimension_numbers<[1], [0], [0], [1], [0, 0, 1, 1], [], []>} : vector<16x128xf32>, vector<128x32xf32>, vector<16x32xf32> -> vector<16x32xf32>
    %c0_i32_10 = arith.constant 0 : i32
    %19 = arith.cmpi ne, %arg1, %c0_i32_10 : i32
    %20 = arith.extui %19 : i1 to i32
    %c0_i32_11 = arith.constant 0 : i32
    %21 = arith.cmpi ne, %20, %c0_i32_11 : i32
    scf.if %21 {
      %c0_14 = arith.constant 0 : index
      %c0_15 = arith.constant 0 : index
      %25 = vector.load %arg6[%c0_14, %c0_15] : memref<16x32xf32, #tpu.memory_space<vmem>>, vector<16x32xf32>
      %26 = arith.addf %25, %18 : vector<16x32xf32>
      %c0_16 = arith.constant 0 : index
      %c0_17 = arith.constant 0 : index
      %27 = vector.load %arg6[%c0_16, %c0_17] : memref<16x32xf32, #tpu.memory_space<vmem>>, vector<16x32xf32>
      tpu.vector_store %arg6[%c0_16, %c0_17], %26 {strides = array<i32>} : memref<16x32xf32, #tpu.memory_space<vmem>>, vector<16x32xf32>,
    } else {
    }
    %c0_i32_12 = arith.constant 0 : i32
    %22 = arith.cmpi eq, %arg1, %c0_i32_12 : i32
    %23 = arith.extui %22 : i1 to i32
    %c0_i32_13 = arith.constant 0 : i32
    %24 = arith.cmpi ne, %23, %c0_i32_13 : i32
    scf.if %24 {
      %c0_14 = arith.constant 0 : index
      %c0_15 = arith.constant 0 : index
      %25 = vector.load %arg6[%c0_14, %c0_15] : memref<16x32xf32, #tpu.memory_space<vmem>>, vector<16x32xf32>
      %26 = arith.addf %25, %18 : vector<16x32xf32>
      %c0_16 = arith.constant 0 : index
      %c0_17 = arith.constant 0 : index
      %27 = vector.load %arg5[%c0_16, %c0_17] : memref<16x32xf32, #tpu.memory_space<vmem>>, vector<16x32xf32>
      tpu.vector_store %arg5[%c0_16, %c0_17], %26 {strides = array<i32>} : memref<16x32xf32, #tpu.memory_space<vmem>>, vector<16x32xf32>,
    } else {
    }
    return
  }
  func.func @transform_0(%arg0: i32, %arg1: i32) -> (i32, i32) {
    %c0_i32 = arith.constant 0 : i32
    %c0_i32_0 = arith.constant 0 : i32
    return %arg0, %c0_i32 : i32, i32
  }
  func.func @transform_1(%arg0: i32, %arg1: i32) -> (i32, i32, i32) {
    %c0_i32 = arith.constant 0 : i32
    %c0_i32_0 = arith.constant 0 : i32
    %c0_i32_1 = arith.constant 0 : i32
    return %arg1, %c0_i32, %c0_i32_0 : i32, i32, i32
  }
  func.func @transform_2(%arg0: i32, %arg1: i32) -> (i32, i32, i32) {
    %c0_i32 = arith.constant 0 : i32
    %c0_i32_0 = arith.constant 0 : i32
    %c0_i32_1 = arith.constant 0 : i32
    return %arg1, %c0_i32, %c0_i32_0 : i32, i32, i32
  }
  func.func @transform_3(%arg0: i32, %arg1: i32) -> (i32, i32) {
    %c0_i32 = arith.constant 0 : i32
    %c0_i32_0 = arith.constant 0 : i32
    return %arg0, %c0_i32 : i32, i32
  }
}

</mosaic_0001>

<llo_original>
// kernel: tpu_custom_call.1
$region0: #{tpu_custom_call.1}
  #allocation0 [shape = 'u32[]', space=smem, size = 0x4, offset = 0x4, fixed_abs, tag = 'smem constant byte address 0x4 - core index']
  #allocation1 [shape = 'u32[144,128]{1,0:T(1,128)}', space=vmem, size = 0x12000, scoped, tag = 'internal scratch']
  #allocation2 [shape = 'f32[16,32]{1,0:T(8,128)}', space=vmem, size = 0x2000, scoped, tag = 'scratch operand']
  %s0 = inlined_call_operand.vmem [shape: f32[16,32], index: 0, kind: input, shape index: {}]
  %s1 = inlined_call_operand.vmem [shape: f32[1,32,256], index: 1, kind: input, shape index: {}]
  %s2 = inlined_call_operand.vmem [shape: f32[1,128,32], index: 2, kind: input, shape index: {}]
  %s3 = inlined_call_operand.hbm [shape: f32[16,32], index: 3, kind: output, shape index: {}]
  %s4 = sld [smem:[#allocation0]]
  $region34: #{tpu_custom_call.1} parent=0
    _
  %s6 = ssub.s32 1, %s4
  %s7 = scalar_select 0, %s6, %s4
  $region1: #{tpu_custom_call.1} parent=0
    #allocation3 [shape = 'u8[8192]{0}', space=vmem, size = 0x2000, scoped, tag = 'output window, operand 0, single buffered']
    #allocation4 [shape = 's32[1]{0}', space=sflag, size = 0x4, scoped, tag = 'scoped memory for tpu_custom_call.1']
    %8 = vsyncpa [#allocation4], 0
    // Predicated region
    $region2: #{tpu_custom_call.1} parent=1 // pred_check
      _
    $region3: #{tpu_custom_call.1} parent=1 // pred_check_branch
      %10 = sbr.rel (0) target = $region5
    $region4: #{tpu_custom_call.1} parent=1 // pred_region
      _
    $region5: #{tpu_custom_call.1} parent=1 // pred_fallthru
      _
    // Predicated region
    $region6: #{tpu_custom_call.1} parent=1 // pred_check
      _
    $region7: #{tpu_custom_call.1} parent=1 // pred_check_branch
      %12 = sbr.rel (0) target = $region9
    $region8: #{tpu_custom_call.1} parent=1 // pred_region
      _
    $region9: #{tpu_custom_call.1} parent=1 // pred_fallthru
      _
    // Predicated region
    $region10: #{tpu_custom_call.1} parent=1 // pred_check
      _
    $region11: #{tpu_custom_call.1} parent=1 // pred_check_branch
      %14 = sbr.rel (0) target = $region13
    $region12: #{tpu_custom_call.1} parent=1 // pred_region
      _
    $region13: #{tpu_custom_call.1} parent=1 // pred_fallthru
      _
    %p15 = scmp.eq.s32.totalorder 0, 0
    // Predicated region
    $region14: #{tpu_custom_call.1} parent=1 // pred_check
      %p16 = pneg %p15
    $region15: #{tpu_custom_call.1} parent=1 // pred_check_branch
      %18 = sbr.rel (%p16) target = $region17
    $region16: #{tpu_custom_call.1} parent=1 // pred_region
      %vm19 = vcmask 261120
      %20 = vst.msk [vmem:[#allocation2] sm:$0xff] %vm19, 0.0
      %21 = vst.msk [vmem:[#allocation2 + $0x8] sm:$0xff] %vm19, 0.0
    $region17: #{tpu_custom_call.1} parent=1 // pred_fallthru
      _
    %v22 = vld [vmem:[%s0] sm:$0xff]
    %v23 = vld [vmem:[%s0 + $0x8] sm:$0xff]
    %v24 = vld [vmem:[%s1] sm:$0xff]
    %v25 = vld [vmem:[%s1 + $0x8] sm:$0xff]
    %v26 = vld [vmem:[%s1 + $0x10] sm:$0xff]
    %v27 = vld [vmem:[%s1 + $0x18] sm:$0xff]
    %v28 = vld [vmem:[%s1 + $0x20] sm:$0xff]
    %v29 = vld [vmem:[%s1 + $0x28] sm:$0xff]
    %v30 = vld [vmem:[%s1 + $0x30] sm:$0xff]
    %v31 = vld [vmem:[%s1 + $0x38] sm:$0xff]
    %vm32 = vcmask 261120
    %v34 = vsel %vm32, %v22, 0
    %v37 = vsel %vm32, %v23, 0
    %39 = vmatprep.subr.mxu0 0.0
    %40 = vmatpush1.msra.mxu0 0.0
    %41 = vmatprep.subr.mxu0 0.0
    %42 = vmatpush1.msra.mxu0 0.0
    %43 = vmatprep.subr.mxu0 0.0
    %44 = vmatpush1.msra.mxu0 0.0
    %45 = vmatprep.subr.mxu0 0.0
    %46 = vmatpush1.msra.mxu0 0.0
    %47 = vmatprep.subr.mxu0 0.0
    %48 = vmatpush1.msra.mxu0 0.0
    %49 = vmatprep.subr.mxu0 0.0
    %50 = vmatpush1.msra.mxu0 0.0
    %51 = vmatprep.subr.mxu0 0.0
    %52 = vmatpush1.msra.mxu0 0.0
    %53 = vmatprep.subr.mxu0 0.0
    %54 = vmatpush1.msra.mxu0 0.0
    %55 = vmatprep.subr.mxu0 0.0
    %56 = vmatpush1.msra.mxu0 0.0
    %57 = vmatprep.subr.mxu0 0.0
    %58 = vmatpush1.msra.mxu0 0.0
    %59 = vmatprep.subr.mxu0 0.0
    %60 = vmatpush1.msra.mxu0 0.0
    %61 = vmatprep.subr.mxu0 0.0
    %62 = vmatpush1.msra.mxu0 0.0
    %63 = vmatprep.subr.mxu0 %v31
    %64 = vmatpush1.msra.mxu0 %v30
    %65 = vmatprep.subr.mxu0 %v29
    %66 = vmatpush1.msra.mxu0 %v28
    %67 = vmatprep.subr.mxu0 %v27
    %68 = vmatpush1.msra.mxu0 %v26
    %69 = vmatprep.subr.mxu0 %v25
    %70 = vmatpush1.msra.mxu0 %v24
    %71 = vmatprep.subr.mxu0 0.0
    %72 = vmatpush2.msra.mxu0 0.0
    %73 = vmatprep.subr.mxu0 0.0
    %74 = vmatpush2.msra.mxu0 0.0
    %75 = vmatprep.subr.mxu0 0.0
    %76 = vmatpush2.msra.mxu0 0.0
    %77 = vmatprep.subr.mxu0 0.0
    %78 = vmatpush2.msra.mxu0 0.0
    %79 = vmatprep.subr.mxu0 0.0
    %80 = vmatpush2.msra.mxu0 0.0
    %81 = vmatprep.subr.mxu0 0.0
    %82 = vmatpush2.msra.mxu0 0.0
    %83 = vmatprep.subr.mxu0 0.0
    %84 = vmatpush2.msra.mxu0 0.0
    %85 = vmatprep.subr.mxu0 0.0
    %86 = vmatpush2.msra.mxu0 0.0
    %87 = vmatprep.subr.mxu0 0.0
    %88 = vmatpush2.msra.mxu0 0.0
    %89 = vmatprep.subr.mxu0 0.0
    %90 = vmatpush2.msra.mxu0 0.0
    %91 = vmatprep.subr.mxu0 0.0
    %92 = vmatpush2.msra.mxu0 0.0
    %93 = vmatprep.subr.mxu0 0.0
    %94 = vmatpush2.msra.mxu0 0.0
    %95 = vmatprep.subr.mxu0 0.0
    %96 = vmatpush2.msra.mxu0 0.0
    %97 = vmatprep.subr.mxu0 0.0
    %98 = vmatpush2.msra.mxu0 0.0
    %99 = vmatprep.subr.mxu0 0.0
    %100 = vmatpush2.msra.mxu0 0.0
    %101 = vmatprep.subr.mxu0 0.0
    %102 = vmatpush2.msra.mxu0 0.0
    %103 = vmatprep.mubr.f32.mxu0 0.0
    %104 = vmatmul.mubr.f32.gmra.mxu0 %v34
    %v105 = vpop.f32.mrf.mxu0
    %v106 = vadd.f32 0.0, %v105
    %v107 = vpop.f32.mrf.mxu0
    %v108 = vadd.f32 0.0, %v107
    %109 = vmatprep.mubr.f32.mxu0 0.0
    %110 = vmatmul.mubr.f32.gmra.mxu0 %v37
    %v111 = vpop.f32.mrf.mxu0
    %v112 = vadd.f32 0.0, %v111
    %v113 = vpop.f32.mrf.mxu0
    %v114 = vadd.f32 0.0, %v113
    %115 = vdwg.mxu0
    %v116 = vxor.u32 %v106, 2147483648
    %v117 = vxor.u32 %v112, 2147483648
    %v118 = vmul.f32 %v116, 1.442695
    %v119 = vpow.pop %v118
    %v120 = vmul.f32 %v117, 1.442695
    %v121 = vpow.pop %v120
    %v122 = vadd.f32 %v119, 1.0
    %v123 = vadd.f32 %v121, 1.0
    %v124 = vrcp.pop %v122
    %v125 = vmul.f32 1.0, %v124
    %v126 = vrcp.pop %v123
    %v127 = vmul.f32 1.0, %v126
    %v128 = vmul.f32 %v106, %v125
    %v129 = vmul.f32 %v112, %v127
    %v130 = vmul.f32 %v128, %v108
    %v131 = vmul.f32 %v129, %v114
    %v132 = vld [vmem:[%s2] sm:$0xff]
    %v133 = vld [vmem:[%s2 + $0x8] sm:$0xff]
    %v134 = vld [vmem:[%s2 + $0x10] sm:$0xff]
    %v135 = vld [vmem:[%s2 + $0x18] sm:$0xff]
    %v136 = vld [vmem:[%s2 + $0x20] sm:$0xff]
    %v137 = vld [vmem:[%s2 + $0x28] sm:$0xff]
    %v138 = vld [vmem:[%s2 + $0x30] sm:$0xff]
    %v139 = vld [vmem:[%s2 + $0x38] sm:$0xff]
    %v140 = vld [vmem:[%s2 + $0x40] sm:$0xff]
    %v141 = vld [vmem:[%s2 + $0x48] sm:$0xff]
    %v142 = vld [vmem:[%s2 + $0x50] sm:$0xff]
    %v143 = vld [vmem:[%s2 + $0x58] sm:$0xff]
    %v144 = vld [vmem:[%s2 + $0x60] sm:$0xff]
    %v145 = vld [vmem:[%s2 + $0x68] sm:$0xff]
    %v146 = vld [vmem:[%s2 + $0x70] sm:$0xff]
    %v147 = vld [vmem:[%s2 + $0x78] sm:$0xff]
    %148 = vmatprep.subr.mxu0 0.0
    %149 = vmatpush1.msra.mxu0 %v147
    %150 = vmatprep.subr.mxu0 0.0
    %151 = vmatpush1.msra.mxu0 %v146
    %152 = vmatprep.subr.mxu0 0.0
    %153 = vmatpush1.msra.mxu0 %v145
    %154 = vmatprep.subr.mxu0 0.0
    %155 = vmatpush1.msra.mxu0 %v144
    %156 = vmatprep.subr.mxu0 0.0
    %157 = vmatpush1.msra.mxu0 %v143
    %158 = vmatprep.subr.mxu0 0.0
    %159 = vmatpush1.msra.mxu0 %v142
    %160 = vmatprep.subr.mxu0 0.0
    %161 = vmatpush1.msra.mxu0 %v141
    %162 = vmatprep.subr.mxu0 0.0
    %163 = vmatpush1.msra.mxu0 %v140
    %164 = vmatprep.subr.mxu0 0.0
    %165 = vmatpush1.msra.mxu0 %v139
    %166 = vmatprep.subr.mxu0 0.0
    %167 = vmatpush1.msra.mxu0 %v138
    %168 = vmatprep.subr.mxu0 0.0
    %169 = vmatpush1.msra.mxu0 %v137
    %170 = vmatprep.subr.mxu0 0.0
    %171 = vmatpush1.msra.mxu0 %v136
    %172 = vmatprep.subr.mxu0 0.0
    %173 = vmatpush1.msra.mxu0 %v135
    %174 = vmatprep.subr.mxu0 0.0
    %175 = vmatpush1.msra.mxu0 %v134
    %176 = vmatprep.subr.mxu0 0.0
    %177 = vmatpush1.msra.mxu0 %v133
    %178 = vmatprep.subr.mxu0 0.0
    %179 = vmatpush1.msra.mxu0 %v132
    %180 = vmatprep.subr.mxu0 0.0
    %181 = vmatpush2.msra.mxu0 0.0
    %182 = vmatprep.subr.mxu0 0.0
    %183 = vmatpush2.msra.mxu0 0.0
    %184 = vmatprep.subr.mxu0 0.0
    %185 = vmatpush2.msra.mxu0 0.0
    %186 = vmatprep.subr.mxu0 0.0
    %187 = vmatpush2.msra.mxu0 0.0
    %188 = vmatprep.subr.mxu0 0.0
    %189 = vmatpush2.msra.mxu0 0.0
    %190 = vmatprep.subr.mxu0 0.0
    %191 = vmatpush2.msra.mxu0 0.0
    %192 = vmatprep.subr.mxu0 0.0
    %193 = vmatpush2.msra.mxu0 0.0
    %194 = vmatprep.subr.mxu0 0.0
    %195 = vmatpush2.msra.mxu0 0.0
    %196 = vmatprep.subr.mxu0 0.0
    %197 = vmatpush2.msra.mxu0 0.0
    %198 = vmatprep.subr.mxu0 0.0
    %199 = vmatpush2.msra.mxu0 0.0
    %200 = vmatprep.subr.mxu0 0.0
    %201 = vmatpush2.msra.mxu0 0.0
    %202 = vmatprep.subr.mxu0 0.0
    %203 = vmatpush2.msra.mxu0 0.0
    %204 = vmatprep.subr.mxu0 0.0
    %205 = vmatpush2.msra.mxu0 0.0
    %206 = vmatprep.subr.mxu0 0.0
    %207 = vmatpush2.msra.mxu0 0.0
    %208 = vmatprep.subr.mxu0 0.0
    %209 = vmatpush2.msra.mxu0 0.0
    %210 = vmatprep.subr.mxu0 0.0
    %211 = vmatpush2.msra.mxu0 0.0
    %212 = vmatprep.mubr.f32.mxu0 0.0
    %213 = vmatmul.mubr.f32.gmra.mxu0 %v130
    %v214 = vpop.f32.mrf.mxu0
    %v215 = vadd.f32 0.0, %v214
    %v216 = vpop.f32.mrf.mxu0
    %217 = vmatprep.mubr.f32.mxu0 0.0
    %218 = vmatmul.mubr.f32.gmra.mxu0 %v131
    %v219 = vpop.f32.mrf.mxu0
    %v220 = vadd.f32 0.0, %v219
    %v221 = vpop.f32.mrf.mxu0
    %222 = vdwg.mxu0
    %p223 = scmp.ne.s32.totalorder 0, 0
    // Predicated region
    $region18: #{tpu_custom_call.1} parent=1 // pred_check
      %p224 = pneg %p223
    $region19: #{tpu_custom_call.1} parent=1 // pred_check_branch
      %226 = sbr.rel (%p224) target = $region21
    $region20: #{tpu_custom_call.1} parent=1 // pred_region
      %v227 = vld [vmem:[#allocation2] sm:$0xff]
      %v228 = vld [vmem:[#allocation2 + $0x8] sm:$0xff]
      %v229 = vadd.f32 %v227, %v215
      %v230 = vadd.f32 %v228, %v220
      %231 = vst.msk [vmem:[#allocation2] sm:$0xff] %vm32, %v229
      %232 = vst.msk [vmem:[#allocation2 + $0x8] sm:$0xff] %vm32, %v230
    $region21: #{tpu_custom_call.1} parent=1 // pred_fallthru
      _
    // Predicated region
    $region22: #{tpu_custom_call.1} parent=1 // pred_check
      %p233 = pneg %p15
    $region23: #{tpu_custom_call.1} parent=1 // pred_check_branch
      %235 = sbr.rel (%p233) target = $region25
    $region24: #{tpu_custom_call.1} parent=1 // pred_region
      %v236 = vld [vmem:[#allocation2] sm:$0xff]
      %v237 = vld [vmem:[#allocation2 + $0x8] sm:$0xff]
      %v238 = vadd.f32 %v236, %v215
      %v239 = vadd.f32 %v237, %v220
      %240 = vst.msk [vmem:[#allocation3] sm:$0xff] %vm32, %v238
      %241 = vst.msk [vmem:[#allocation3 + $0x8] sm:$0xff] %vm32, %v239
    $region25: #{tpu_custom_call.1} parent=1 // pred_fallthru
      _
    // Predicated region
    $region26: #{tpu_custom_call.1} parent=1 // pred_check
      _
    $region27: #{tpu_custom_call.1} parent=1 // pred_check_branch
      %243 = sbr.rel (0) target = $region29
    $region28: #{tpu_custom_call.1} parent=1 // pred_region
      %s245 = ssub.s32 256, 256
      %246 = vsyncadd [#allocation4], %s245
      %s247 = sshll.u32 [#allocation3], 4
      %s248 = int_to_ptr.vmem [resolvable:$true] %s247
      %253 = dma.vmem_to_hbm [thread:$0]  %s248, 256, %s3, [#allocation4], 128, 128, 8
    $region29: #{tpu_custom_call.1} parent=1 // pred_fallthru
      _
    // Predicated region
    $region30: #{tpu_custom_call.1} parent=1 // pred_check
      _
    $region31: #{tpu_custom_call.1} parent=1 // pred_check_branch
      %255 = sbr.rel (0) target = $region33
    $region32: #{tpu_custom_call.1} parent=1 // pred_region
      %256 = dma.done [#allocation4], 256
    $region33: #{tpu_custom_call.1} parent=1 // pred_fallthru
      _
    %257 = vsyncpa [#allocation4], 1

</llo_original>
